<compile_context>
chip_gen: v5e
topology: v5e:2x2
jax: 0.10.0
libtpu: 0.0.40
codegen_flags: <defaults>
</compile_context>

<pallas_src>
import functools

import numpy as np
import jax
import jax.numpy as jnp
from jax.experimental import pallas as pl
from jax.experimental.pallas import tpu as pltpu


def _round_up(n, m):
    return ((n + m - 1) // m) * m


def _pack_rows(blocks):
    """Stack 2-D blocks along axis 0, padding each block to a multiple of 8
    rows so every segment starts on a sublane-group boundary.

    Returns (slab, list_of_static_row_offsets)."""
    width = blocks[0].shape[1]
    offs, parts, row = [], [], 0
    for b in blocks:
        offs.append(row)
        rows = b.shape[0]
        pad = (-rows) % 8
        if pad:
            b = jnp.concatenate([b, jnp.zeros((pad, width), b.dtype)], axis=0)
        parts.append(b)
        row += rows + pad
    return jnp.concatenate(parts, axis=0), offs


def _rnn_net_kernel(feats_ref,   # (T*Bp, I)  f32, time-major flattened
                    wslab_ref,   # packed RNN weights + biases, width H
                    fcslab_ref,  # packed fc weight + bias, width Cp
                    out_ref,     # (Bp, Cp)
                    *, T, B, I, H, C, w_offs, fc_offs):
    w = wslab_ref[...]                                   # one VMEM load
    o_ih0, o_hh0, o_ih1, o_hh1, o_ih2, o_hh2, o_b0, o_b1, o_b2 = w_offs
    w_ih0 = w[o_ih0:o_ih0 + I, :]
    w_hh0 = w[o_hh0:o_hh0 + H, :]
    w_ih1 = w[o_ih1:o_ih1 + H, :]
    w_hh1 = w[o_hh1:o_hh1 + H, :]
    w_ih2 = w[o_ih2:o_ih2 + H, :]
    w_hh2 = w[o_hh2:o_hh2 + H, :]
    b0 = w[o_b0:o_b0 + 1, :]                             # folded into x_proj
    # Hoisted bias broadcasts (done once, not per timestep).
    b1 = jnp.broadcast_to(w[o_b1:o_b1 + 1, :], (B, H))
    b2 = jnp.broadcast_to(w[o_b2:o_b2 + 1, :], (B, H))

    fcw = fcslab_ref[...]
    o_wfc, o_bfc = fc_offs
    w_fc = fcw[o_wfc:o_wfc + H, :]                       # (H, Cp)
    b_fc = jnp.broadcast_to(fcw[o_bfc:o_bfc + 1, :], (B, C))

    # Layer-0 input projection for ALL timesteps in one matmul (+ b0 folded).
    x_proj = (jnp.dot(feats_ref[...], w_ih0,
                      preferred_element_type=jnp.float32) + b0)   # (T*B, H)

    h0 = jnp.zeros((B, H), jnp.float32)
    h1 = jnp.zeros((B, H), jnp.float32)
    h2 = jnp.zeros((B, H), jnp.float32)

    # Fully unrolled time loop (T is small and static).
    for t in range(T):
        # Self-recurrent contributions depend only on t-1 state: issue them
        # first so they run OFF the serial dot->tanh critical path.
        r1 = jnp.dot(h1, w_hh1, preferred_element_type=jnp.float32)
        r2 = jnp.dot(h2, w_hh2, preferred_element_type=jnp.float32)

        x0 = x_proj[t * B:(t + 1) * B, :]                # 8-aligned sublane slice
        # Layer 0: only the recurrent matmul is on the serial chain.
        h0 = jnp.tanh(x0 + jnp.dot(h0, w_hh0,
                                   preferred_element_type=jnp.float32))
        # Layers 1 & 2: only the "input from layer below" dot is on-chain.
        h1 = jnp.tanh(jnp.dot(h0, w_ih1,
                              preferred_element_type=jnp.float32) + r1 + b1)
        h2 = jnp.tanh(jnp.dot(h1, w_ih2,
                              preferred_element_type=jnp.float32) + r2 + b2)

    # fc(final hidden of last layer) — lane-dense (Cp = multiple of 128) store.
    out_ref[...] = (jnp.dot(h2, w_fc,
                            preferred_element_type=jnp.float32) + b_fc)


def rnn_net_forward(feats, params):
    """feats: (B, T, I) float32 (batch_first, like PyTorch).  Returns (B, C)."""
    B, T, I = feats.shape
    H = params["w_hh0"].shape[0]
    C = params["w_fc"].shape[0]

    B_pad = _round_up(max(B, 8), 8)       # full sublane group
    C_pad = _round_up(max(C, 128), 128)   # lane-dense output store

    # batch_first (B,T,I) -> time-major, pad batch, flatten: step t lives in
    # rows [t*B_pad, (t+1)*B_pad) — an 8-aligned sublane window.
    feats_tm = jnp.transpose(feats, (1, 0, 2)).astype(jnp.float32)  # (T,B,I)
    if B_pad != B:
        feats_tm = jnp.pad(feats_tm, ((0, 0), (0, B_pad - B), (0, 0)))
    feats_flat = feats_tm.reshape(T * B_pad, I)

    # Single packed slab for the RNN weights + (folded) biases, width H.
    wslab, w_offs = _pack_rows([
        params["w_ih0"].T.astype(jnp.float32),                         # (I,H)
        params["w_hh0"].T.astype(jnp.float32),                         # (H,H)
        params["w_ih1"].T.astype(jnp.float32),
        params["w_hh1"].T.astype(jnp.float32),
        params["w_ih2"].T.astype(jnp.float32),
        params["w_hh2"].T.astype(jnp.float32),
        (params["b_ih0"] + params["b_hh0"]).reshape(1, H).astype(jnp.float32),
        (params["b_ih1"] + params["b_hh1"]).reshape(1, H).astype(jnp.float32),
        (params["b_ih2"] + params["b_hh2"]).reshape(1, H).astype(jnp.float32),
    ])

    # Packed, lane-padded fc slab, width C_pad.
    w_fc_pad = jnp.zeros((H, C_pad), jnp.float32).at[:, :C].set(
        params["w_fc"].T.astype(jnp.float32))
    b_fc_pad = jnp.zeros((1, C_pad), jnp.float32).at[:, :C].set(
        params["b_fc"].reshape(1, C).astype(jnp.float32))
    fcslab, fc_offs = _pack_rows([w_fc_pad, b_fc_pad])

    kernel = functools.partial(
        _rnn_net_kernel, T=T, B=B_pad, I=I, H=H, C=C_pad,
        w_offs=tuple(w_offs), fc_offs=tuple(fc_offs))

    vmem_spec = pl.BlockSpec(memory_space=pltpu.MemorySpace.VMEM)
    out_pad = pl.pallas_call(
        kernel,
        out_shape=jax.ShapeDtypeStruct((B_pad, C_pad), jnp.float32),
        in_specs=[vmem_spec, vmem_spec, vmem_spec],
        out_specs=vmem_spec,
    )(feats_flat, wslab, fcslab)

    return out_pad[:B, :C]


def init_params(key, input_size, hidden_size, num_classes):
    """Deterministic init matching the PyTorch module's parameter shapes."""
    ks = jax.random.split(key, 14)
    k_rnn = 1.0 / np.sqrt(hidden_size)
    u = lambda k, shape, bound: jax.random.uniform(
        k, shape, jnp.float32, minval=-bound, maxval=bound)
    return {
        # layer 0: input_size -> hidden
        "w_ih0": u(ks[0], (hidden_size, input_size), k_rnn),
        "w_hh0": u(ks[1], (hidden_size, hidden_size), k_rnn),
        "b_ih0": u(ks[2], (hidden_size,), k_rnn),
        "b_hh0": u(ks[3], (hidden_size,), k_rnn),
        # layer 1: hidden -> hidden
        "w_ih1": u(ks[4], (hidden_size, hidden_size), k_rnn),
        "w_hh1": u(ks[5], (hidden_size, hidden_size), k_rnn),
        "b_ih1": u(ks[6], (hidden_size,), k_rnn),
        "b_hh1": u(ks[7], (hidden_size,), k_rnn),
        # layer 2: hidden -> hidden
        "w_ih2": u(ks[8], (hidden_size, hidden_size), k_rnn),
        "w_hh2": u(ks[9], (hidden_size, hidden_size), k_rnn),
        "b_ih2": u(ks[10], (hidden_size,), k_rnn),
        "b_hh2": u(ks[11], (hidden_size,), k_rnn),
        # fc head
        "w_fc": u(ks[12], (num_classes, hidden_size), 1.0 / np.sqrt(hidden_size)),
        "b_fc": u(ks[13], (num_classes,), 1.0 / np.sqrt(hidden_size)),
    }


def rnn_net_reference(feats, params):
    """Pure-JAX f32 reference of the PyTorch forward (for correctness check)."""
    B, T, I = feats.shape
    H = params["w_hh0"].shape[0]
    h = [jnp.zeros((B, H), jnp.float32) for _ in range(3)]
    for t in range(T):
        x = feats[:, t, :]
        h[0] = jnp.tanh(x @ params["w_ih0"].T + params["b_ih0"]
                        + h[0] @ params["w_hh0"].T + params["b_hh0"])
        h[1] = jnp.tanh(h[0] @ params["w_ih1"].T + params["b_ih1"]
                        + h[1] @ params["w_hh1"].T + params["b_hh1"])
        h[2] = jnp.tanh(h[1] @ params["w_ih2"].T + params["b_ih2"]
                        + h[2] @ params["w_hh2"].T + params["b_hh2"])
    return h[2] @ params["w_fc"].T + params["b_fc"]


if __name__ == "__main__":
    batch_size, seq_len, input_size, hidden_size, num_classes = 2, 8, 16, 32, 10

    key = jax.random.PRNGKey(0)
    k_feats, k_params = jax.random.split(key)
    feats = jax.random.normal(k_feats, (batch_size, seq_len, input_size),
                              dtype=jnp.float32)
    params = init_params(k_params, input_size, hidden_size, num_classes)

    out = rnn_net_forward(feats, params)
    out = jax.block_until_ready(out)

    ref = rnn_net_reference(feats, params)
    np.testing.assert_allclose(np.asarray(out), np.asarray(ref),
                               rtol=2e-2, atol=2e-2)
    assert out.shape == (batch_size, num_classes)
    print("KERNEL_OK")
</pallas_src>

<mosaic_0001>
module attributes {stable_mosaic.version = 11 : i64} {
  func.func @_rnn_net_kernel(%arg0: memref<64x16xf32, #tpu.memory_space<vmem>>, %arg1: memref<200x32xf32, #tpu.memory_space<vmem>>, %arg2: memref<40x128xf32, #tpu.memory_space<vmem>>, %arg3: memref<8x128xf32, #tpu.memory_space<vmem>>) attributes {dimension_semantics = [], scalar_prefetch = 0 : i64, scratch_operands = 0 : i64, tpu.core_type = #tpu.core_type<tc>} {
    %c0 = arith.constant 0 : index
    %c0_0 = arith.constant 0 : index
    %0 = vector.load %arg1[%c0, %c0_0] : memref<200x32xf32, #tpu.memory_space<vmem>>, vector<200x32xf32>
    %1 = vector.extract_strided_slice %0 {offsets = [0, 0], sizes = [16, 32], strides = [1, 1]} : vector<200x32xf32> to vector<16x32xf32>
    %2 = vector.extract_strided_slice %0 {offsets = [16, 0], sizes = [32, 32], strides = [1, 1]} : vector<200x32xf32> to vector<32x32xf32>
    %3 = vector.extract_strided_slice %0 {offsets = [48, 0], sizes = [32, 32], strides = [1, 1]} : vector<200x32xf32> to vector<32x32xf32>
    %4 = vector.extract_strided_slice %0 {offsets = [80, 0], sizes = [32, 32], strides = [1, 1]} : vector<200x32xf32> to vector<32x32xf32>
    %5 = vector.extract_strided_slice %0 {offsets = [112, 0], sizes = [32, 32], strides = [1, 1]} : vector<200x32xf32> to vector<32x32xf32>
    %6 = vector.extract_strided_slice %0 {offsets = [144, 0], sizes = [32, 32], strides = [1, 1]} : vector<200x32xf32> to vector<32x32xf32>
    %7 = vector.extract_strided_slice %0 {offsets = [176, 0], sizes = [1, 32], strides = [1, 1]} : vector<200x32xf32> to vector<1x32xf32>
    %8 = vector.extract_strided_slice %0 {offsets = [184, 0], sizes = [1, 32], strides = [1, 1]} : vector<200x32xf32> to vector<1x32xf32>
    %9 = vector.shape_cast %8 : vector<1x32xf32> to vector<1x32xf32>
    %10 = vector.broadcast %9 : vector<1x32xf32> to vector<8x32xf32>
    %11 = vector.extract_strided_slice %0 {offsets = [192, 0], sizes = [1, 32], strides = [1, 1]} : vector<200x32xf32> to vector<1x32xf32>
    %12 = vector.shape_cast %11 : vector<1x32xf32> to vector<1x32xf32>
    %13 = vector.broadcast %12 : vector<1x32xf32> to vector<8x32xf32>
    %c0_1 = arith.constant 0 : index
    %c0_2 = arith.constant 0 : index
    %14 = vector.load %arg2[%c0_1, %c0_2] : memref<40x128xf32, #tpu.memory_space<vmem>>, vector<40x128xf32>
    %15 = vector.extract_strided_slice %14 {offsets = [0, 0], sizes = [32, 128], strides = [1, 1]} : vector<40x128xf32> to vector<32x128xf32>
    %16 = vector.extract_strided_slice %14 {offsets = [32, 0], sizes = [1, 128], strides = [1, 1]} : vector<40x128xf32> to vector<1x128xf32>
    %17 = vector.shape_cast %16 : vector<1x128xf32> to vector<1x128xf32>
    %18 = vector.broadcast %17 : vector<1x128xf32> to vector<8x128xf32>
    %c0_3 = arith.constant 0 : index
    %c0_4 = arith.constant 0 : index
    %19 = vector.load %arg0[%c0_3, %c0_4] : memref<64x16xf32, #tpu.memory_space<vmem>>, vector<64x16xf32>
    %cst = arith.constant dense<0.000000e+00> : vector<64x32xf32>
    %20 = tpu.matmul %19, %1, %cst {dimension_numbers = #tpu.dot_dimension_numbers<[1], [0], [0], [1], [0, 0, 1, 1], [], []>} : vector<64x16xf32>, vector<16x32xf32>, vector<64x32xf32> -> vector<64x32xf32>
    %21 = vector.broadcast %7 : vector<1x32xf32> to vector<64x32xf32>
    %22 = arith.addf %20, %21 : vector<64x32xf32>
    %cst_5 = arith.constant 0.000000e+00 : f32
    %23 = vector.broadcast %cst_5 : f32 to vector<8x32xf32>
    %cst_6 = arith.constant 0.000000e+00 : f32
    %24 = vector.broadcast %cst_6 : f32 to vector<8x32xf32>
    %cst_7 = arith.constant 0.000000e+00 : f32
    %25 = vector.broadcast %cst_7 : f32 to vector<8x32xf32>
    %cst_8 = arith.constant dense<0.000000e+00> : vector<8x32xf32>
    %26 = tpu.matmul %24, %4, %cst_8 {dimension_numbers = #tpu.dot_dimension_numbers<[1], [0], [0], [1], [0, 0, 1, 1], [], []>} : vector<8x32xf32>, vector<32x32xf32>, vector<8x32xf32> -> vector<8x32xf32>
    %cst_9 = arith.constant dense<0.000000e+00> : vector<8x32xf32>
    %27 = tpu.matmul %25, %6, %cst_9 {dimension_numbers = #tpu.dot_dimension_numbers<[1], [0], [0], [1], [0, 0, 1, 1], [], []>} : vector<8x32xf32>, vector<32x32xf32>, vector<8x32xf32> -> vector<8x32xf32>
    %28 = vector.extract_strided_slice %22 {offsets = [0, 0], sizes = [8, 32], strides = [1, 1]} : vector<64x32xf32> to vector<8x32xf32>
    %cst_10 = arith.constant dense<0.000000e+00> : vector<8x32xf32>
    %29 = tpu.matmul %23, %2, %cst_10 {dimension_numbers = #tpu.dot_dimension_numbers<[1], [0], [0], [1], [0, 0, 1, 1], [], []>} : vector<8x32xf32>, vector<32x32xf32>, vector<8x32xf32> -> vector<8x32xf32>
    %30 = arith.addf %28, %29 : vector<8x32xf32>
    %31 = math.tanh %30 : vector<8x32xf32>
    %cst_11 = arith.constant dense<0.000000e+00> : vector<8x32xf32>
    %32 = tpu.matmul %31, %3, %cst_11 {dimension_numbers = #tpu.dot_dimension_numbers<[1], [0], [0], [1], [0, 0, 1, 1], [], []>} : vector<8x32xf32>, vector<32x32xf32>, vector<8x32xf32> -> vector<8x32xf32>
    %33 = arith.addf %32, %26 : vector<8x32xf32>
    %34 = arith.addf %33, %10 : vector<8x32xf32>
    %35 = math.tanh %34 : vector<8x32xf32>
    %cst_12 = arith.constant dense<0.000000e+00> : vector<8x32xf32>
    %36 = tpu.matmul %35, %5, %cst_12 {dimension_numbers = #tpu.dot_dimension_numbers<[1], [0], [0], [1], [0, 0, 1, 1], [], []>} : vector<8x32xf32>, vector<32x32xf32>, vector<8x32xf32> -> vector<8x32xf32>
    %37 = arith.addf %36, %27 : vector<8x32xf32>
    %38 = arith.addf %37, %13 : vector<8x32xf32>
    %39 = math.tanh %38 : vector<8x32xf32>
    %cst_13 = arith.constant dense<0.000000e+00> : vector<8x32xf32>
    %40 = tpu.matmul %35, %4, %cst_13 {dimension_numbers = #tpu.dot_dimension_numbers<[1], [0], [0], [1], [0, 0, 1, 1], [], []>} : vector<8x32xf32>, vector<32x32xf32>, vector<8x32xf32> -> vector<8x32xf32>
    %cst_14 = arith.constant dense<0.000000e+00> : vector<8x32xf32>
    %41 = tpu.matmul %39, %6, %cst_14 {dimension_numbers = #tpu.dot_dimension_numbers<[1], [0], [0], [1], [0, 0, 1, 1], [], []>} : vector<8x32xf32>, vector<32x32xf32>, vector<8x32xf32> -> vector<8x32xf32>
    %42 = vector.extract_strided_slice %22 {offsets = [8, 0], sizes = [8, 32], strides = [1, 1]} : vector<64x32xf32> to vector<8x32xf32>
    %cst_15 = arith.constant dense<0.000000e+00> : vector<8x32xf32>
    %43 = tpu.matmul %31, %2, %cst_15 {dimension_numbers = #tpu.dot_dimension_numbers<[1], [0], [0], [1], [0, 0, 1, 1], [], []>} : vector<8x32xf32>, vector<32x32xf32>, vector<8x32xf32> -> vector<8x32xf32>
    %44 = arith.addf %42, %43 : vector<8x32xf32>
    %45 = math.tanh %44 : vector<8x32xf32>
    %cst_16 = arith.constant dense<0.000000e+00> : vector<8x32xf32>
    %46 = tpu.matmul %45, %3, %cst_16 {dimension_numbers = #tpu.dot_dimension_numbers<[1], [0], [0], [1], [0, 0, 1, 1], [], []>} : vector<8x32xf32>, vector<32x32xf32>, vector<8x32xf32> -> vector<8x32xf32>
    %47 = arith.addf %46, %40 : vector<8x32xf32>
    %48 = arith.addf %47, %10 : vector<8x32xf32>
    %49 = math.tanh %48 : vector<8x32xf32>
    %cst_17 = arith.constant dense<0.000000e+00> : vector<8x32xf32>
    %50 = tpu.matmul %49, %5, %cst_17 {dimension_numbers = #tpu.dot_dimension_numbers<[1], [0], [0], [1], [0, 0, 1, 1], [], []>} : vector<8x32xf32>, vector<32x32xf32>, vector<8x32xf32> -> vector<8x32xf32>
    %51 = arith.addf %50, %41 : vector<8x32xf32>
    %52 = arith.addf %51, %13 : vector<8x32xf32>
    %53 = math.tanh %52 : vector<8x32xf32>
    %cst_18 = arith.constant dense<0.000000e+00> : vector<8x32xf32>
    %54 = tpu.matmul %49, %4, %cst_18 {dimension_numbers = #tpu.dot_dimension_numbers<[1], [0], [0], [1], [0, 0, 1, 1], [], []>} : vector<8x32xf32>, vector<32x32xf32>, vector<8x32xf32> -> vector<8x32xf32>
    %cst_19 = arith.constant dense<0.000000e+00> : vector<8x32xf32>
    %55 = tpu.matmul %53, %6, %cst_19 {dimension_numbers = #tpu.dot_dimension_numbers<[1], [0], [0], [1], [0, 0, 1, 1], [], []>} : vector<8x32xf32>, vector<32x32xf32>, vector<8x32xf32> -> vector<8x32xf32>
    %56 = vector.extract_strided_slice %22 {offsets = [16, 0], sizes = [8, 32], strides = [1, 1]} : vector<64x32xf32> to vector<8x32xf32>
    %cst_20 = arith.constant dense<0.000000e+00> : vector<8x32xf32>
    %57 = tpu.matmul %45, %2, %cst_20 {dimension_numbers = #tpu.dot_dimension_numbers<[1], [0], [0], [1], [0, 0, 1, 1], [], []>} : vector<8x32xf32>, vector<32x32xf32>, vector<8x32xf32> -> vector<8x32xf32>
    %58 = arith.addf %56, %57 : vector<8x32xf32>
    %59 = math.tanh %58 : vector<8x32xf32>
    %cst_21 = arith.constant dense<0.000000e+00> : vector<8x32xf32>
    %60 = tpu.matmul %59, %3, %cst_21 {dimension_numbers = #tpu.dot_dimension_numbers<[1], [0], [0], [1], [0, 0, 1, 1], [], []>} : vector<8x32xf32>, vector<32x32xf32>, vector<8x32xf32> -> vector<8x32xf32>
    %61 = arith.addf %60, %54 : vector<8x32xf32>
    %62 = arith.addf %61, %10 : vector<8x32xf32>
    %63 = math.tanh %62 : vector<8x32xf32>
    %cst_22 = arith.constant dense<0.000000e+00> : vector<8x32xf32>
    %64 = tpu.matmul %63, %5, %cst_22 {dimension_numbers = #tpu.dot_dimension_numbers<[1], [0], [0], [1], [0, 0, 1, 1], [], []>} : vector<8x32xf32>, vector<32x32xf32>, vector<8x32xf32> -> vector<8x32xf32>
    %65 = arith.addf %64, %55 : vector<8x32xf32>
    %66 = arith.addf %65, %13 : vector<8x32xf32>
    %67 = math.tanh %66 : vector<8x32xf32>
    %cst_23 = arith.constant dense<0.000000e+00> : vector<8x32xf32>
    %68 = tpu.matmul %63, %4, %cst_23 {dimension_numbers = #tpu.dot_dimension_numbers<[1], [0], [0], [1], [0, 0, 1, 1], [], []>} : vector<8x32xf32>, vector<32x32xf32>, vector<8x32xf32> -> vector<8x32xf32>
    %cst_24 = arith.constant dense<0.000000e+00> : vector<8x32xf32>
    %69 = tpu.matmul %67, %6, %cst_24 {dimension_numbers = #tpu.dot_dimension_numbers<[1], [0], [0], [1], [0, 0, 1, 1], [], []>} : vector<8x32xf32>, vector<32x32xf32>, vector<8x32xf32> -> vector<8x32xf32>
    %70 = vector.extract_strided_slice %22 {offsets = [24, 0], sizes = [8, 32], strides = [1, 1]} : vector<64x32xf32> to vector<8x32xf32>
    %cst_25 = arith.constant dense<0.000000e+00> : vector<8x32xf32>
    %71 = tpu.matmul %59, %2, %cst_25 {dimension_numbers = #tpu.dot_dimension_numbers<[1], [0], [0], [1], [0, 0, 1, 1], [], []>} : vector<8x32xf32>, vector<32x32xf32>, vector<8x32xf32> -> vector<8x32xf32>
    %72 = arith.addf %70, %71 : vector<8x32xf32>
    %73 = math.tanh %72 : vector<8x32xf32>
    %cst_26 = arith.constant dense<0.000000e+00> : vector<8x32xf32>
    %74 = tpu.matmul %73, %3, %cst_26 {dimension_numbers = #tpu.dot_dimension_numbers<[1], [0], [0], [1], [0, 0, 1, 1], [], []>} : vector<8x32xf32>, vector<32x32xf32>, vector<8x32xf32> -> vector<8x32xf32>
    %75 = arith.addf %74, %68 : vector<8x32xf32>
    %76 = arith.addf %75, %10 : vector<8x32xf32>
    %77 = math.tanh %76 : vector<8x32xf32>
    %cst_27 = arith.constant dense<0.000000e+00> : vector<8x32xf32>
    %78 = tpu.matmul %77, %5, %cst_27 {dimension_numbers = #tpu.dot_dimension_numbers<[1], [0], [0], [1], [0, 0, 1, 1], [], []>} : vector<8x32xf32>, vector<32x32xf32>, vector<8x32xf32> -> vector<8x32xf32>
    %79 = arith.addf %78, %69 : vector<8x32xf32>
    %80 = arith.addf %79, %13 : vector<8x32xf32>
    %81 = math.tanh %80 : vector<8x32xf32>
    %cst_28 = arith.constant dense<0.000000e+00> : vector<8x32xf32>
    %82 = tpu.matmul %77, %4, %cst_28 {dimension_numbers = #tpu.dot_dimension_numbers<[1], [0], [0], [1], [0, 0, 1, 1], [], []>} : vector<8x32xf32>, vector<32x32xf32>, vector<8x32xf32> -> vector<8x32xf32>
    %cst_29 = arith.constant dense<0.000000e+00> : vector<8x32xf32>
    %83 = tpu.matmul %81, %6, %cst_29 {dimension_numbers = #tpu.dot_dimension_numbers<[1], [0], [0], [1], [0, 0, 1, 1], [], []>} : vector<8x32xf32>, vector<32x32xf32>, vector<8x32xf32> -> vector<8x32xf32>
    %84 = vector.extract_strided_slice %22 {offsets = [32, 0], sizes = [8, 32], strides = [1, 1]} : vector<64x32xf32> to vector<8x32xf32>
    %cst_30 = arith.constant dense<0.000000e+00> : vector<8x32xf32>
    %85 = tpu.matmul %73, %2, %cst_30 {dimension_numbers = #tpu.dot_dimension_numbers<[1], [0], [0], [1], [0, 0, 1, 1], [], []>} : vector<8x32xf32>, vector<32x32xf32>, vector<8x32xf32> -> vector<8x32xf32>
    %86 = arith.addf %84, %85 : vector<8x32xf32>
    %87 = math.tanh %86 : vector<8x32xf32>
    %cst_31 = arith.constant dense<0.000000e+00> : vector<8x32xf32>
    %88 = tpu.matmul %87, %3, %cst_31 {dimension_numbers = #tpu.dot_dimension_numbers<[1], [0], [0], [1], [0, 0, 1, 1], [], []>} : vector<8x32xf32>, vector<32x32xf32>, vector<8x32xf32> -> vector<8x32xf32>
    %89 = arith.addf %88, %82 : vector<8x32xf32>
    %90 = arith.addf %89, %10 : vector<8x32xf32>
    %91 = math.tanh %90 : vector<8x32xf32>
    %cst_32 = arith.constant dense<0.000000e+00> : vector<8x32xf32>
    %92 = tpu.matmul %91, %5, %cst_32 {dimension_numbers = #tpu.dot_dimension_numbers<[1], [0], [0], [1], [0, 0, 1, 1], [], []>} : vector<8x32xf32>, vector<32x32xf32>, vector<8x32xf32> -> vector<8x32xf32>
    %93 = arith.addf %92, %83 : vector<8x32xf32>
    %94 = arith.addf %93, %13 : vector<8x32xf32>
    %95 = math.tanh %94 : vector<8x32xf32>
    %cst_33 = arith.constant dense<0.000000e+00> : vector<8x32xf32>
    %96 = tpu.matmul %91, %4, %cst_33 {dimension_numbers = #tpu.dot_dimension_numbers<[1], [0], [0], [1], [0, 0, 1, 1], [], []>} : vector<8x32xf32>, vector<32x32xf32>, vector<8x32xf32> -> vector<8x32xf32>
    %cst_34 = arith.constant dense<0.000000e+00> : vector<8x32xf32>
    %97 = tpu.matmul %95, %6, %cst_34 {dimension_numbers = #tpu.dot_dimension_numbers<[1], [0], [0], [1], [0, 0, 1, 1], [], []>} : vector<8x32xf32>, vector<32x32xf32>, vector<8x32xf32> -> vector<8x32xf32>
    %98 = vector.extract_strided_slice %22 {offsets = [40, 0], sizes = [8, 32], strides = [1, 1]} : vector<64x32xf32> to vector<8x32xf32>
    %cst_35 = arith.constant dense<0.000000e+00> : vector<8x32xf32>
    %99 = tpu.matmul %87, %2, %cst_35 {dimension_numbers = #tpu.dot_dimension_numbers<[1], [0], [0], [1], [0, 0, 1, 1], [], []>} : vector<8x32xf32>, vector<32x32xf32>, vector<8x32xf32> -> vector<8x32xf32>
    %100 = arith.addf %98, %99 : vector<8x32xf32>
    %101 = math.tanh %100 : vector<8x32xf32>
    %cst_36 = arith.constant dense<0.000000e+00> : vector<8x32xf32>
    %102 = tpu.matmul %101, %3, %cst_36 {dimension_numbers = #tpu.dot_dimension_numbers<[1], [0], [0], [1], [0, 0, 1, 1], [], []>} : vector<8x32xf32>, vector<32x32xf32>, vector<8x32xf32> -> vector<8x32xf32>
    %103 = arith.addf %102, %96 : vector<8x32xf32>
    %104 = arith.addf %103, %10 : vector<8x32xf32>
    %105 = math.tanh %104 : vector<8x32xf32>
    %cst_37 = arith.constant dense<0.000000e+00> : vector<8x32xf32>
    %106 = tpu.matmul %105, %5, %cst_37 {dimension_numbers = #tpu.dot_dimension_numbers<[1], [0], [0], [1], [0, 0, 1, 1], [], []>} : vector<8x32xf32>, vector<32x32xf32>, vector<8x32xf32> -> vector<8x32xf32>
    %107 = arith.addf %106, %97 : vector<8x32xf32>
    %108 = arith.addf %107, %13 : vector<8x32xf32>
    %109 = math.tanh %108 : vector<8x32xf32>
    %cst_38 = arith.constant dense<0.000000e+00> : vector<8x32xf32>
    %110 = tpu.matmul %105, %4, %cst_38 {dimension_numbers = #tpu.dot_dimension_numbers<[1], [0], [0], [1], [0, 0, 1, 1], [], []>} : vector<8x32xf32>, vector<32x32xf32>, vector<8x32xf32> -> vector<8x32xf32>
    %cst_39 = arith.constant dense<0.000000e+00> : vector<8x32xf32>
    %111 = tpu.matmul %109, %6, %cst_39 {dimension_numbers = #tpu.dot_dimension_numbers<[1], [0], [0], [1], [0, 0, 1, 1], [], []>} : vector<8x32xf32>, vector<32x32xf32>, vector<8x32xf32> -> vector<8x32xf32>
    %112 = vector.extract_strided_slice %22 {offsets = [48, 0], sizes = [8, 32], strides = [1, 1]} : vector<64x32xf32> to vector<8x32xf32>
    %cst_40 = arith.constant dense<0.000000e+00> : vector<8x32xf32>
    %113 = tpu.matmul %101, %2, %cst_40 {dimension_numbers = #tpu.dot_dimension_numbers<[1], [0], [0], [1], [0, 0, 1, 1], [], []>} : vector<8x32xf32>, vector<32x32xf32>, vector<8x32xf32> -> vector<8x32xf32>
    %114 = arith.addf %112, %113 : vector<8x32xf32>
    %115 = math.tanh %114 : vector<8x32xf32>
    %cst_41 = arith.constant dense<0.000000e+00> : vector<8x32xf32>
    %116 = tpu.matmul %115, %3, %cst_41 {dimension_numbers = #tpu.dot_dimension_numbers<[1], [0], [0], [1], [0, 0, 1, 1], [], []>} : vector<8x32xf32>, vector<32x32xf32>, vector<8x32xf32> -> vector<8x32xf32>
    %117 = arith.addf %116, %110 : vector<8x32xf32>
    %118 = arith.addf %117, %10 : vector<8x32xf32>
    %119 = math.tanh %118 : vector<8x32xf32>
    %cst_42 = arith.constant dense<0.000000e+00> : vector<8x32xf32>
    %120 = tpu.matmul %119, %5, %cst_42 {dimension_numbers = #tpu.dot_dimension_numbers<[1], [0], [0], [1], [0, 0, 1, 1], [], []>} : vector<8x32xf32>, vector<32x32xf32>, vector<8x32xf32> -> vector<8x32xf32>
    %121 = arith.addf %120, %111 : vector<8x32xf32>
    %122 = arith.addf %121, %13 : vector<8x32xf32>
    %123 = math.tanh %122 : vector<8x32xf32>
    %cst_43 = arith.constant dense<0.000000e+00> : vector<8x32xf32>
    %124 = tpu.matmul %119, %4, %cst_43 {dimension_numbers = #tpu.dot_dimension_numbers<[1], [0], [0], [1], [0, 0, 1, 1], [], []>} : vector<8x32xf32>, vector<32x32xf32>, vector<8x32xf32> -> vector<8x32xf32>
    %cst_44 = arith.constant dense<0.000000e+00> : vector<8x32xf32>
    %125 = tpu.matmul %123, %6, %cst_44 {dimension_numbers = #tpu.dot_dimension_numbers<[1], [0], [0], [1], [0, 0, 1, 1], [], []>} : vector<8x32xf32>, vector<32x32xf32>, vector<8x32xf32> -> vector<8x32xf32>
    %126 = vector.extract_strided_slice %22 {offsets = [56, 0], sizes = [8, 32], strides = [1, 1]} : vector<64x32xf32> to vector<8x32xf32>
    %cst_45 = arith.constant dense<0.000000e+00> : vector<8x32xf32>
    %127 = tpu.matmul %115, %2, %cst_45 {dimension_numbers = #tpu.dot_dimension_numbers<[1], [0], [0], [1], [0, 0, 1, 1], [], []>} : vector<8x32xf32>, vector<32x32xf32>, vector<8x32xf32> -> vector<8x32xf32>
    %128 = arith.addf %126, %127 : vector<8x32xf32>
    %129 = math.tanh %128 : vector<8x32xf32>
    %cst_46 = arith.constant dense<0.000000e+00> : vector<8x32xf32>
    %130 = tpu.matmul %129, %3, %cst_46 {dimension_numbers = #tpu.dot_dimension_numbers<[1], [0], [0], [1], [0, 0, 1, 1], [], []>} : vector<8x32xf32>, vector<32x32xf32>, vector<8x32xf32> -> vector<8x32xf32>
    %131 = arith.addf %130, %124 : vector<8x32xf32>
    %132 = arith.addf %131, %10 : vector<8x32xf32>
    %133 = math.tanh %132 : vector<8x32xf32>
    %cst_47 = arith.constant dense<0.000000e+00> : vector<8x32xf32>
    %134 = tpu.matmul %133, %5, %cst_47 {dimension_numbers = #tpu.dot_dimension_numbers<[1], [0], [0], [1], [0, 0, 1, 1], [], []>} : vector<8x32xf32>, vector<32x32xf32>, vector<8x32xf32> -> vector<8x32xf32>
    %135 = arith.addf %134, %125 : vector<8x32xf32>
    %136 = arith.addf %135, %13 : vector<8x32xf32>
    %137 = math.tanh %136 : vector<8x32xf32>
    %cst_48 = arith.constant dense<0.000000e+00> : vector<8x128xf32>
    %138 = tpu.matmul %137, %15, %cst_48 {dimension_numbers = #tpu.dot_dimension_numbers<[1], [0], [0], [1], [0, 0, 1, 1], [], []>} : vector<8x32xf32>, vector<32x128xf32>, vector<8x128xf32> -> vector<8x128xf32>
    %139 = arith.addf %138, %18 : vector<8x128xf32>
    %c0_49 = arith.constant 0 : index
    %c0_50 = arith.constant 0 : index
    %140 = vector.load %arg3[%c0_49, %c0_50] : memref<8x128xf32, #tpu.memory_space<vmem>>, vector<8x128xf32>
    tpu.vector_store %arg3[%c0_49, %c0_50], %139 {strides = array<i32>} : memref<8x128xf32, #tpu.memory_space<vmem>>, vector<8x128xf32>,
    return
  }
}

</mosaic_0001>

<llo_original>
// kernel: tpu_custom_call.1
$region0: #{tpu_custom_call.1}
  #allocation0 [shape = 'u32[]', space=smem, size = 0x4, offset = 0x4, fixed_abs, tag = 'smem constant byte address 0x4 - core index']
  #allocation1 [shape = 'u32[72,128]{1,0:T(1,128)}', space=vmem, size = 0x9000, scoped, tag = 'internal scratch']
  %s0 = inlined_call_operand.vmem [shape: f32[64,16], index: 0, kind: input, shape index: {}]
  %s1 = inlined_call_operand.vmem [shape: f32[200,32], index: 1, kind: input, shape index: {}]
  %s2 = inlined_call_operand.vmem [shape: f32[40,128], index: 2, kind: input, shape index: {}]
  %s3 = inlined_call_operand.hbm [shape: f32[8,128], index: 3, kind: output, shape index: {}]
  %s4 = sld [smem:[#allocation0]]
  $region22: #{tpu_custom_call.1} parent=0
    _
  %s6 = ssub.s32 1, %s4
  %s7 = scalar_select 0, %s6, %s4
  $region1: #{tpu_custom_call.1} parent=0
    #allocation2 [shape = 'u8[4096]{0}', space=vmem, size = 0x1000, scoped, tag = 'output window, operand 0, single buffered']
    #allocation3 [shape = 's32[1]{0}', space=sflag, size = 0x4, scoped, tag = 'scoped memory for tpu_custom_call.1']
    %8 = vsyncpa [#allocation3], 0
    // Predicated region
    $region2: #{tpu_custom_call.1} parent=1 // pred_check
      _
    $region3: #{tpu_custom_call.1} parent=1 // pred_check_branch
      %10 = sbr.rel (0) target = $region5
    $region4: #{tpu_custom_call.1} parent=1 // pred_region
      _
    $region5: #{tpu_custom_call.1} parent=1 // pred_fallthru
      _
    // Predicated region
    $region6: #{tpu_custom_call.1} parent=1 // pred_check
      _
    $region7: #{tpu_custom_call.1} parent=1 // pred_check_branch
      %12 = sbr.rel (0) target = $region9
    $region8: #{tpu_custom_call.1} parent=1 // pred_region
      _
    $region9: #{tpu_custom_call.1} parent=1 // pred_fallthru
      _
    // Predicated region
    $region10: #{tpu_custom_call.1} parent=1 // pred_check
      _
    $region11: #{tpu_custom_call.1} parent=1 // pred_check_branch
      %14 = sbr.rel (0) target = $region13
    $region12: #{tpu_custom_call.1} parent=1 // pred_region
      _
    $region13: #{tpu_custom_call.1} parent=1 // pred_fallthru
      _
    %v15 = vld [vmem:[%s1] sm:$0xff]
    %v16 = vld [vmem:[%s1 + $0x8] sm:$0xff]
    %v17 = vld [vmem:[%s1 + $0x10] sm:$0xff]
    %v18 = vld [vmem:[%s1 + $0x18] sm:$0xff]
    %v19 = vld [vmem:[%s1 + $0x20] sm:$0xff]
    %v20 = vld [vmem:[%s1 + $0x28] sm:$0xff]
    %v21 = vld [vmem:[%s1 + $0x30] sm:$0xff]
    %v22 = vld [vmem:[%s1 + $0x38] sm:$0xff]
    %v23 = vld [vmem:[%s1 + $0x40] sm:$0xff]
    %v24 = vld [vmem:[%s1 + $0x48] sm:$0xff]
    %v25 = vld [vmem:[%s1 + $0x50] sm:$0xff]
    %v26 = vld [vmem:[%s1 + $0x58] sm:$0xff]
    %v27 = vld [vmem:[%s1 + $0x60] sm:$0xff]
    %v28 = vld [vmem:[%s1 + $0x68] sm:$0xff]
    %v29 = vld [vmem:[%s1 + $0x70] sm:$0xff]
    %v30 = vld [vmem:[%s1 + $0x78] sm:$0xff]
    %v31 = vld [vmem:[%s1 + $0x80] sm:$0xff]
    %v32 = vld [vmem:[%s1 + $0x88] sm:$0xff]
    %v33 = vld [vmem:[%s1 + $0x90] sm:$0xff]
    %v34 = vld [vmem:[%s1 + $0x98] sm:$0xff]
    %v35 = vld [vmem:[%s1 + $0xa0] sm:$0xff]
    %v36 = vld [vmem:[%s1 + $0xa8] sm:$0xff]
    %v37 = vld [vmem:[%s1 + $0xb0] sm:$0xff]
    %v38 = vld [vmem:[%s1 + $0xb8] sm:$0xff]
    %v39 = vld [vmem:[%s1 + $0xc0] sm:$0xff]
    %v40 = vperm.slane %v38, 0
    %v41 = vperm.slane %v39, 0
    %v42 = vld [vmem:[%s2] sm:$0xff]
    %v43 = vld [vmem:[%s2 + $0x8] sm:$0xff]
    %v44 = vld [vmem:[%s2 + $0x10] sm:$0xff]
    %v45 = vld [vmem:[%s2 + $0x18] sm:$0xff]
    %v46 = vld [vmem:[%s2 + $0x20] sm:$0xff]
    %v47 = vperm.slane %v46, 0
    %v48 = vld [vmem:[%s0] sm:$0xff]
    %v49 = vld [vmem:[%s0 + $0x8] sm:$0xff]
    %v50 = vld [vmem:[%s0 + $0x10] sm:$0xff]
    %v51 = vld [vmem:[%s0 + $0x18] sm:$0xff]
    %v52 = vld [vmem:[%s0 + $0x20] sm:$0xff]
    %v53 = vld [vmem:[%s0 + $0x28] sm:$0xff]
    %v54 = vld [vmem:[%s0 + $0x30] sm:$0xff]
    %v55 = vld [vmem:[%s0 + $0x38] sm:$0xff]
    %v56 = vperm.slane %v37, 0
    %vm57 = vcmask 130048
    %v59 = vsel %vm57, %v48, 0
    %v62 = vsel %vm57, %v49, 0
    %v65 = vsel %vm57, %v50, 0
    %v68 = vsel %vm57, %v51, 0
    %v71 = vsel %vm57, %v52, 0
    %v74 = vsel %vm57, %v53, 0
    %v77 = vsel %vm57, %v54, 0
    %v80 = vsel %vm57, %v55, 0
    %82 = vmatpush.msra.mxu0 0.0
    %83 = vmatpush.msra.mxu0 0.0
    %84 = vmatpush.msra.mxu0 0.0
    %85 = vmatpush.msra.mxu0 0.0
    %86 = vmatpush.msra.mxu0 0.0
    %87 = vmatpush.msra.mxu0 0.0
    %88 = vmatpush.msra.mxu0 0.0
    %89 = vmatpush.msra.mxu0 0.0
    %90 = vmatpush.msra.mxu0 0.0
    %91 = vmatpush.msra.mxu0 0.0
    %92 = vmatpush.msra.mxu0 0.0
    %93 = vmatpush.msra.mxu0 0.0
    %94 = vmatpush.msra.mxu0 0.0
    %95 = vmatpush.msra.mxu0 0.0
    %96 = vmatpush.msra.mxu0 %v16
    %97 = vmatpush.msra.mxu0 %v15
    %98 = vmatmul.f32.gmra.mxu0 %v59
    %v99 = vpop.f32.mrf.mxu0
    %v100 = vadd.f32 %v56, %v99
    %101 = vmatmul.f32.gmra.mxu0 %v62
    %v102 = vpop.f32.mrf.mxu0
    %v103 = vadd.f32 %v56, %v102
    %104 = vmatmul.f32.gmra.mxu0 %v65
    %v105 = vpop.f32.mrf.mxu0
    %v106 = vadd.f32 %v56, %v105
    %107 = vmatmul.f32.gmra.mxu0 %v68
    %v108 = vpop.f32.mrf.mxu0
    %v109 = vadd.f32 %v56, %v108
    %110 = vmatmul.f32.gmra.mxu0 %v71
    %v111 = vpop.f32.mrf.mxu0
    %v112 = vadd.f32 %v56, %v111
    %113 = vmatmul.f32.gmra.mxu0 %v74
    %v114 = vpop.f32.mrf.mxu0
    %v115 = vadd.f32 %v56, %v114
    %116 = vmatmul.f32.gmra.mxu0 %v77
    %v117 = vpop.f32.mrf.mxu0
    %v118 = vadd.f32 %v56, %v117
    %119 = vmatmul.f32.gmra.mxu0 %v80
    %v120 = vpop.f32.mrf.mxu0
    %v121 = vadd.f32 %v56, %v120
    %122 = vdwg.mxu0
    %vm123 = vcmask 261120
    %v125 = vsel %vm123, 0.0, 0
    %127 = vmatpush.msra.mxu0 0.0
    %128 = vmatpush.msra.mxu0 0.0
    %129 = vmatpush.msra.mxu0 0.0
    %130 = vmatpush.msra.mxu0 0.0
    %131 = vmatpush.msra.mxu0 0.0
    %132 = vmatpush.msra.mxu0 0.0
    %133 = vmatpush.msra.mxu0 0.0
    %134 = vmatpush.msra.mxu0 0.0
    %135 = vmatpush.msra.mxu0 0.0
    %136 = vmatpush.msra.mxu0 0.0
    %137 = vmatpush.msra.mxu0 0.0
    %138 = vmatpush.msra.mxu0 0.0
    %139 = vmatpush.msra.mxu0 %v28
    %140 = vmatpush.msra.mxu0 %v27
    %141 = vmatpush.msra.mxu0 %v26
    %142 = vmatpush.msra.mxu0 %v25
    %143 = vmatmul.f32.gmra.mxu0 %v125
    %v144 = vpop.f32.mrf.mxu0
    %v145 = vadd.f32 0.0, %v144
    %146 = vdwg.mxu0
    %147 = vmatpush.msra.mxu0 0.0
    %148 = vmatpush.msra.mxu0 0.0
    %149 = vmatpush.msra.mxu0 0.0
    %150 = vmatpush.msra.mxu0 0.0
    %151 = vmatpush.msra.mxu0 0.0
    %152 = vmatpush.msra.mxu0 0.0
    %153 = vmatpush.msra.mxu0 0.0
    %154 = vmatpush.msra.mxu0 0.0
    %155 = vmatpush.msra.mxu0 0.0
    %156 = vmatpush.msra.mxu0 0.0
    %157 = vmatpush.msra.mxu0 0.0
    %158 = vmatpush.msra.mxu0 0.0
    %159 = vmatpush.msra.mxu0 %v36
    %160 = vmatpush.msra.mxu0 %v35
    %161 = vmatpush.msra.mxu0 %v34
    %162 = vmatpush.msra.mxu0 %v33
    %163 = vmatmul.f32.gmra.mxu0 %v125
    %v164 = vpop.f32.mrf.mxu0
    %v165 = vadd.f32 0.0, %v164
    %166 = vdwg.mxu0
    %167 = vmatpush.msra.mxu0 0.0
    %168 = vmatpush.msra.mxu0 0.0
    %169 = vmatpush.msra.mxu0 0.0
    %170 = vmatpush.msra.mxu0 0.0
    %171 = vmatpush.msra.mxu0 0.0
    %172 = vmatpush.msra.mxu0 0.0
    %173 = vmatpush.msra.mxu0 0.0
    %174 = vmatpush.msra.mxu0 0.0
    %175 = vmatpush.msra.mxu0 0.0
    %176 = vmatpush.msra.mxu0 0.0
    %177 = vmatpush.msra.mxu0 0.0
    %178 = vmatpush.msra.mxu0 0.0
    %179 = vmatpush.msra.mxu0 %v20
    %180 = vmatpush.msra.mxu0 %v19
    %181 = vmatpush.msra.mxu0 %v18
    %182 = vmatpush.msra.mxu0 %v17
    %183 = vmatmul.f32.gmra.mxu0 %v125
    %v184 = vpop.f32.mrf.mxu0
    %v185 = vadd.f32 0.0, %v184
    %186 = vdwg.mxu0
    %v187 = vadd.f32 %v100, %v185
    %v188 = vtanh.pop %v187
    %v190 = vsel %vm123, %v188, 0
    %192 = vmatpush.msra.mxu0 0.0
    %193 = vmatpush.msra.mxu0 0.0
    %194 = vmatpush.msra.mxu0 0.0
    %195 = vmatpush.msra.mxu0 0.0
    %196 = vmatpush.msra.mxu0 0.0
    %197 = vmatpush.msra.mxu0 0.0
    %198 = vmatpush.msra.mxu0 0.0
    %199 = vmatpush.msra.mxu0 0.0
    %200 = vmatpush.msra.mxu0 0.0
    %201 = vmatpush.msra.mxu0 0.0
    %202 = vmatpush.msra.mxu0 0.0
    %203 = vmatpush.msra.mxu0 0.0
    %204 = vmatpush.msra.mxu0 %v24
    %205 = vmatpush.msra.mxu0 %v23
    %206 = vmatpush.msra.mxu0 %v22
    %207 = vmatpush.msra.mxu0 %v21
    %208 = vmatmul.f32.gmra.mxu0 %v190
    %v209 = vpop.f32.mrf.mxu0
    %v210 = vadd.f32 %v145, %v209
    %211 = vdwg.mxu0
    %v212 = vadd.f32 %v210, %v40
    %v213 = vtanh.pop %v212
    %v215 = vsel %vm123, %v213, 0
    %217 = vmatpush.msra.mxu0 0.0
    %218 = vmatpush.msra.mxu0 0.0
    %219 = vmatpush.msra.mxu0 0.0
    %220 = vmatpush.msra.mxu0 0.0
    %221 = vmatpush.msra.mxu0 0.0
    %222 = vmatpush.msra.mxu0 0.0
    %223 = vmatpush.msra.mxu0 0.0
    %224 = vmatpush.msra.mxu0 0.0
    %225 = vmatpush.msra.mxu0 0.0
    %226 = vmatpush.msra.mxu0 0.0
    %227 = vmatpush.msra.mxu0 0.0
    %228 = vmatpush.msra.mxu0 0.0
    %229 = vmatpush.msra.mxu0 %v32
    %230 = vmatpush.msra.mxu0 %v31
    %231 = vmatpush.msra.mxu0 %v30
    %232 = vmatpush.msra.mxu0 %v29
    %233 = vmatmul.f32.gmra.mxu0 %v215
    %v234 = vpop.f32.mrf.mxu0
    %v235 = vadd.f32 %v165, %v234
    %236 = vdwg.mxu0
    %v237 = vadd.f32 %v235, %v41
    %v238 = vtanh.pop %v237
    %239 = vmatpush.msra.mxu0 0.0
    %240 = vmatpush.msra.mxu0 0.0
    %241 = vmatpush.msra.mxu0 0.0
    %242 = vmatpush.msra.mxu0 0.0
    %243 = vmatpush.msra.mxu0 0.0
    %244 = vmatpush.msra.mxu0 0.0
    %245 = vmatpush.msra.mxu0 0.0
    %246 = vmatpush.msra.mxu0 0.0
    %247 = vmatpush.msra.mxu0 0.0
    %248 = vmatpush.msra.mxu0 0.0
    %249 = vmatpush.msra.mxu0 0.0
    %250 = vmatpush.msra.mxu0 0.0
    %251 = vmatpush.msra.mxu0 %v28
    %252 = vmatpush.msra.mxu0 %v27
    %253 = vmatpush.msra.mxu0 %v26
    %254 = vmatpush.msra.mxu0 %v25
    %255 = vmatmul.f32.gmra.mxu0 %v215
    %v256 = vpop.f32.mrf.mxu0
    %v257 = vadd.f32 0.0, %v256
    %258 = vdwg.mxu0
    %v260 = vsel %vm123, %v238, 0
    %262 = vmatpush.msra.mxu0 0.0
    %263 = vmatpush.msra.mxu0 0.0
    %264 = vmatpush.msra.mxu0 0.0
    %265 = vmatpush.msra.mxu0 0.0
    %266 = vmatpush.msra.mxu0 0.0
    %267 = vmatpush.msra.mxu0 0.0
    %268 = vmatpush.msra.mxu0 0.0
    %269 = vmatpush.msra.mxu0 0.0
    %270 = vmatpush.msra.mxu0 0.0
    %271 = vmatpush.msra.mxu0 0.0
    %272 = vmatpush.msra.mxu0 0.0
    %273 = vmatpush.msra.mxu0 0.0
    %274 = vmatpush.msra.mxu0 %v36
    %275 = vmatpush.msra.mxu0 %v35
    %276 = vmatpush.msra.mxu0 %v34
    %277 = vmatpush.msra.mxu0 %v33
    %278 = vmatmul.f32.gmra.mxu0 %v260
    %v279 = vpop.f32.mrf.mxu0
    %v280 = vadd.f32 0.0, %v279
    %281 = vdwg.mxu0
    %282 = vmatpush.msra.mxu0 0.0
    %283 = vmatpush.msra.mxu0 0.0
    %284 = vmatpush.msra.mxu0 0.0
    %285 = vmatpush.msra.mxu0 0.0
    %286 = vmatpush.msra.mxu0 0.0
    %287 = vmatpush.msra.mxu0 0.0
    %288 = vmatpush.msra.mxu0 0.0
    %289 = vmatpush.msra.mxu0 0.0
    %290 = vmatpush.msra.mxu0 0.0
    %291 = vmatpush.msra.mxu0 0.0
    %292 = vmatpush.msra.mxu0 0.0
    %293 = vmatpush.msra.mxu0 0.0
    %294 = vmatpush.msra.mxu0 %v20
    %295 = vmatpush.msra.mxu0 %v19
    %296 = vmatpush.msra.mxu0 %v18
    %297 = vmatpush.msra.mxu0 %v17
    %298 = vmatmul.f32.gmra.mxu0 %v190
    %v299 = vpop.f32.mrf.mxu0
    %v300 = vadd.f32 0.0, %v299
    %301 = vdwg.mxu0
    %v302 = vadd.f32 %v103, %v300
    %v303 = vtanh.pop %v302
    %v305 = vsel %vm123, %v303, 0
    %307 = vmatpush.msra.mxu0 0.0
    %308 = vmatpush.msra.mxu0 0.0
    %309 = vmatpush.msra.mxu0 0.0
    %310 = vmatpush.msra.mxu0 0.0
    %311 = vmatpush.msra.mxu0 0.0
    %312 = vmatpush.msra.mxu0 0.0
    %313 = vmatpush.msra.mxu0 0.0
    %314 = vmatpush.msra.mxu0 0.0
    %315 = vmatpush.msra.mxu0 0.0
    %316 = vmatpush.msra.mxu0 0.0
    %317 = vmatpush.msra.mxu0 0.0
    %318 = vmatpush.msra.mxu0 0.0
    %319 = vmatpush.msra.mxu0 %v24
    %320 = vmatpush.msra.mxu0 %v23
    %321 = vmatpush.msra.mxu0 %v22
    %322 = vmatpush.msra.mxu0 %v21
    %323 = vmatmul.f32.gmra.mxu0 %v305
    %v324 = vpop.f32.mrf.mxu0
    %v325 = vadd.f32 %v257, %v324
    %326 = vdwg.mxu0
    %v327 = vadd.f32 %v325, %v40
    %v328 = vtanh.pop %v327
    %v330 = vsel %vm123, %v328, 0
    %332 = vmatpush.msra.mxu0 0.0
    %333 = vmatpush.msra.mxu0 0.0
    %334 = vmatpush.msra.mxu0 0.0
    %335 = vmatpush.msra.mxu0 0.0
    %336 = vmatpush.msra.mxu0 0.0
    %337 = vmatpush.msra.mxu0 0.0
    %338 = vmatpush.msra.mxu0 0.0
    %339 = vmatpush.msra.mxu0 0.0
    %340 = vmatpush.msra.mxu0 0.0
    %341 = vmatpush.msra.mxu0 0.0
    %342 = vmatpush.msra.mxu0 0.0
    %343 = vmatpush.msra.mxu0 0.0
    %344 = vmatpush.msra.mxu0 %v32
    %345 = vmatpush.msra.mxu0 %v31
    %346 = vmatpush.msra.mxu0 %v30
    %347 = vmatpush.msra.mxu0 %v29
    %348 = vmatmul.f32.gmra.mxu0 %v330
    %v349 = vpop.f32.mrf.mxu0
    %v350 = vadd.f32 %v280, %v349
    %351 = vdwg.mxu0
    %v352 = vadd.f32 %v350, %v41
    %v353 = vtanh.pop %v352
    %354 = vmatpush.msra.mxu0 0.0
    %355 = vmatpush.msra.mxu0 0.0
    %356 = vmatpush.msra.mxu0 0.0
    %357 = vmatpush.msra.mxu0 0.0
    %358 = vmatpush.msra.mxu0 0.0
    %359 = vmatpush.msra.mxu0 0.0
    %360 = vmatpush.msra.mxu0 0.0
    %361 = vmatpush.msra.mxu0 0.0
    %362 = vmatpush.msra.mxu0 0.0
    %363 = vmatpush.msra.mxu0 0.0
    %364 = vmatpush.msra.mxu0 0.0
    %365 = vmatpush.msra.mxu0 0.0
    %366 = vmatpush.msra.mxu0 %v28
    %367 = vmatpush.msra.mxu0 %v27
    %368 = vmatpush.msra.mxu0 %v26
    %369 = vmatpush.msra.mxu0 %v25
    %370 = vmatmul.f32.gmra.mxu0 %v330
    %v371 = vpop.f32.mrf.mxu0
    %v372 = vadd.f32 0.0, %v371
    %373 = vdwg.mxu0
    %v375 = vsel %vm123, %v353, 0
    %377 = vmatpush.msra.mxu0 0.0
    %378 = vmatpush.msra.mxu0 0.0
    %379 = vmatpush.msra.mxu0 0.0
    %380 = vmatpush.msra.mxu0 0.0
    %381 = vmatpush.msra.mxu0 0.0
    %382 = vmatpush.msra.mxu0 0.0
    %383 = vmatpush.msra.mxu0 0.0
    %384 = vmatpush.msra.mxu0 0.0
    %385 = vmatpush.msra.mxu0 0.0
    %386 = vmatpush.msra.mxu0 0.0
    %387 = vmatpush.msra.mxu0 0.0
    %388 = vmatpush.msra.mxu0 0.0
    %389 = vmatpush.msra.mxu0 %v36
    %390 = vmatpush.msra.mxu0 %v35
    %391 = vmatpush.msra.mxu0 %v34
    %392 = vmatpush.msra.mxu0 %v33
    %393 = vmatmul.f32.gmra.mxu0 %v375
    %v394 = vpop.f32.mrf.mxu0
    %v395 = vadd.f32 0.0, %v394
    %396 = vdwg.mxu0
    %397 = vmatpush.msra.mxu0 0.0
    %398 = vmatpush.msra.mxu0 0.0
    %399 = vmatpush.msra.mxu0 0.0
    %400 = vmatpush.msra.mxu0 0.0
    %401 = vmatpush.msra.mxu0 0.0
    %402 = vmatpush.msra.mxu0 0.0
    %403 = vmatpush.msra.mxu0 0.0
    %404 = vmatpush.msra.mxu0 0.0
    %405 = vmatpush.msra.mxu0 0.0
    %406 = vmatpush.msra.mxu0 0.0
    %407 = vmatpush.msra.mxu0 0.0
    %408 = vmatpush.msra.mxu0 0.0
    %409 = vmatpush.msra.mxu0 %v20
    %410 = vmatpush.msra.mxu0 %v19
    %411 = vmatpush.msra.mxu0 %v18
    %412 = vmatpush.msra.mxu0 %v17
    %413 = vmatmul.f32.gmra.mxu0 %v305
    %v414 = vpop.f32.mrf.mxu0
    %v415 = vadd.f32 0.0, %v414
    %416 = vdwg.mxu0
    %v417 = vadd.f32 %v106, %v415
    %v418 = vtanh.pop %v417
    %v420 = vsel %vm123, %v418, 0
    %422 = vmatpush.msra.mxu0 0.0
    %423 = vmatpush.msra.mxu0 0.0
    %424 = vmatpush.msra.mxu0 0.0
    %425 = vmatpush.msra.mxu0 0.0
    %426 = vmatpush.msra.mxu0 0.0
    %427 = vmatpush.msra.mxu0 0.0
    %428 = vmatpush.msra.mxu0 0.0
    %429 = vmatpush.msra.mxu0 0.0
    %430 = vmatpush.msra.mxu0 0.0
    %431 = vmatpush.msra.mxu0 0.0
    %432 = vmatpush.msra.mxu0 0.0
    %433 = vmatpush.msra.mxu0 0.0
    %434 = vmatpush.msra.mxu0 %v24
    %435 = vmatpush.msra.mxu0 %v23
    %436 = vmatpush.msra.mxu0 %v22
    %437 = vmatpush.msra.mxu0 %v21
    %438 = vmatmul.f32.gmra.mxu0 %v420
    %v439 = vpop.f32.mrf.mxu0
    %v440 = vadd.f32 %v372, %v439
    %441 = vdwg.mxu0
    %v442 = vadd.f32 %v440, %v40
    %v443 = vtanh.pop %v442
    %v445 = vsel %vm123, %v443, 0
    %447 = vmatpush.msra.mxu0 0.0
    %448 = vmatpush.msra.mxu0 0.0
    %449 = vmatpush.msra.mxu0 0.0
    %450 = vmatpush.msra.mxu0 0.0
    %451 = vmatpush.msra.mxu0 0.0
    %452 = vmatpush.msra.mxu0 0.0
    %453 = vmatpush.msra.mxu0 0.0
    %454 = vmatpush.msra.mxu0 0.0
    %455 = vmatpush.msra.mxu0 0.0
    %456 = vmatpush.msra.mxu0 0.0
    %457 = vmatpush.msra.mxu0 0.0
    %458 = vmatpush.msra.mxu0 0.0
    %459 = vmatpush.msra.mxu0 %v32
    %460 = vmatpush.msra.mxu0 %v31
    %461 = vmatpush.msra.mxu0 %v30
    %462 = vmatpush.msra.mxu0 %v29
    %463 = vmatmul.f32.gmra.mxu0 %v445
    %v464 = vpop.f32.mrf.mxu0
    %v465 = vadd.f32 %v395, %v464
    %466 = vdwg.mxu0
    %v467 = vadd.f32 %v465, %v41
    %v468 = vtanh.pop %v467
    %469 = vmatpush.msra.mxu0 0.0
    %470 = vmatpush.msra.mxu0 0.0
    %471 = vmatpush.msra.mxu0 0.0
    %472 = vmatpush.msra.mxu0 0.0
    %473 = vmatpush.msra.mxu0 0.0
    %474 = vmatpush.msra.mxu0 0.0
    %475 = vmatpush.msra.mxu0 0.0
    %476 = vmatpush.msra.mxu0 0.0
    %477 = vmatpush.msra.mxu0 0.0
    %478 = vmatpush.msra.mxu0 0.0
    %479 = vmatpush.msra.mxu0 0.0
    %480 = vmatpush.msra.mxu0 0.0
    %481 = vmatpush.msra.mxu0 %v28
    %482 = vmatpush.msra.mxu0 %v27
    %483 = vmatpush.msra.mxu0 %v26
    %484 = vmatpush.msra.mxu0 %v25
    %485 = vmatmul.f32.gmra.mxu0 %v445
    %v486 = vpop.f32.mrf.mxu0
    %v487 = vadd.f32 0.0, %v486
    %488 = vdwg.mxu0
    %v490 = vsel %vm123, %v468, 0
    %492 = vmatpush.msra.mxu0 0.0
    %493 = vmatpush.msra.mxu0 0.0
    %494 = vmatpush.msra.mxu0 0.0
    %495 = vmatpush.msra.mxu0 0.0
    %496 = vmatpush.msra.mxu0 0.0
    %497 = vmatpush.msra.mxu0 0.0
    %498 = vmatpush.msra.mxu0 0.0
    %499 = vmatpush.msra.mxu0 0.0
    %500 = vmatpush.msra.mxu0 0.0
    %501 = vmatpush.msra.mxu0 0.0
    %502 = vmatpush.msra.mxu0 0.0
    %503 = vmatpush.msra.mxu0 0.0
    %504 = vmatpush.msra.mxu0 %v36
    %505 = vmatpush.msra.mxu0 %v35
    %506 = vmatpush.msra.mxu0 %v34
    %507 = vmatpush.msra.mxu0 %v33
    %508 = vmatmul.f32.gmra.mxu0 %v490
    %v509 = vpop.f32.mrf.mxu0
    %v510 = vadd.f32 0.0, %v509
    %511 = vdwg.mxu0
    %512 = vmatpush.msra.mxu0 0.0
    %513 = vmatpush.msra.mxu0 0.0
    %514 = vmatpush.msra.mxu0 0.0
    %515 = vmatpush.msra.mxu0 0.0
    %516 = vmatpush.msra.mxu0 0.0
    %517 = vmatpush.msra.mxu0 0.0
    %518 = vmatpush.msra.mxu0 0.0
    %519 = vmatpush.msra.mxu0 0.0
    %520 = vmatpush.msra.mxu0 0.0
    %521 = vmatpush.msra.mxu0 0.0
    %522 = vmatpush.msra.mxu0 0.0
    %523 = vmatpush.msra.mxu0 0.0
    %524 = vmatpush.msra.mxu0 %v20
    %525 = vmatpush.msra.mxu0 %v19
    %526 = vmatpush.msra.mxu0 %v18
    %527 = vmatpush.msra.mxu0 %v17
    %528 = vmatmul.f32.gmra.mxu0 %v420
    %v529 = vpop.f32.mrf.mxu0
    %v530 = vadd.f32 0.0, %v529
    %531 = vdwg.mxu0
    %v532 = vadd.f32 %v109, %v530
    %v533 = vtanh.pop %v532
    %v535 = vsel %vm123, %v533, 0
    %537 = vmatpush.msra.mxu0 0.0
    %538 = vmatpush.msra.mxu0 0.0
    %539 = vmatpush.msra.mxu0 0.0
    %540 = vmatpush.msra.mxu0 0.0
    %541 = vmatpush.msra.mxu0 0.0
    %542 = vmatpush.msra.mxu0 0.0
    %543 = vmatpush.msra.mxu0 0.0
    %544 = vmatpush.msra.mxu0 0.0
    %545 = vmatpush.msra.mxu0 0.0
    %546 = vmatpush.msra.mxu0 0.0
    %547 = vmatpush.msra.mxu0 0.0
    %548 = vmatpush.msra.mxu0 0.0
    %549 = vmatpush.msra.mxu0 %v24
    %550 = vmatpush.msra.mxu0 %v23
    %551 = vmatpush.msra.mxu0 %v22
    %552 = vmatpush.msra.mxu0 %v21
    %553 = vmatmul.f32.gmra.mxu0 %v535
    %v554 = vpop.f32.mrf.mxu0
    %v555 = vadd.f32 %v487, %v554
    %556 = vdwg.mxu0
    %v557 = vadd.f32 %v555, %v40
    %v558 = vtanh.pop %v557
    %v560 = vsel %vm123, %v558, 0
    %562 = vmatpush.msra.mxu0 0.0
    %563 = vmatpush.msra.mxu0 0.0
    %564 = vmatpush.msra.mxu0 0.0
    %565 = vmatpush.msra.mxu0 0.0
    %566 = vmatpush.msra.mxu0 0.0
    %567 = vmatpush.msra.mxu0 0.0
    %568 = vmatpush.msra.mxu0 0.0
    %569 = vmatpush.msra.mxu0 0.0
    %570 = vmatpush.msra.mxu0 0.0
    %571 = vmatpush.msra.mxu0 0.0
    %572 = vmatpush.msra.mxu0 0.0
    %573 = vmatpush.msra.mxu0 0.0
    %574 = vmatpush.msra.mxu0 %v32
    %575 = vmatpush.msra.mxu0 %v31
    %576 = vmatpush.msra.mxu0 %v30
    %577 = vmatpush.msra.mxu0 %v29
    %578 = vmatmul.f32.gmra.mxu0 %v560
    %v579 = vpop.f32.mrf.mxu0
    %v580 = vadd.f32 %v510, %v579
    %581 = vdwg.mxu0
    %v582 = vadd.f32 %v580, %v41
    %v583 = vtanh.pop %v582
    %584 = vmatpush.msra.mxu0 0.0
    %585 = vmatpush.msra.mxu0 0.0
    %586 = vmatpush.msra.mxu0 0.0
    %587 = vmatpush.msra.mxu0 0.0
    %588 = vmatpush.msra.mxu0 0.0
    %589 = vmatpush.msra.mxu0 0.0
    %590 = vmatpush.msra.mxu0 0.0
    %591 = vmatpush.msra.mxu0 0.0
    %592 = vmatpush.msra.mxu0 0.0
    %593 = vmatpush.msra.mxu0 0.0
    %594 = vmatpush.msra.mxu0 0.0
    %595 = vmatpush.msra.mxu0 0.0
    %596 = vmatpush.msra.mxu0 %v28
    %597 = vmatpush.msra.mxu0 %v27
    %598 = vmatpush.msra.mxu0 %v26
    %599 = vmatpush.msra.mxu0 %v25
    %600 = vmatmul.f32.gmra.mxu0 %v560
    %v601 = vpop.f32.mrf.mxu0
    %v602 = vadd.f32 0.0, %v601
    %603 = vdwg.mxu0
    %v605 = vsel %vm123, %v583, 0
    %607 = vmatpush.msra.mxu0 0.0
    %608 = vmatpush.msra.mxu0 0.0
    %609 = vmatpush.msra.mxu0 0.0
    %610 = vmatpush.msra.mxu0 0.0
    %611 = vmatpush.msra.mxu0 0.0
    %612 = vmatpush.msra.mxu0 0.0
    %613 = vmatpush.msra.mxu0 0.0
    %614 = vmatpush.msra.mxu0 0.0
    %615 = vmatpush.msra.mxu0 0.0
    %616 = vmatpush.msra.mxu0 0.0
    %617 = vmatpush.msra.mxu0 0.0
    %618 = vmatpush.msra.mxu0 0.0
    %619 = vmatpush.msra.mxu0 %v36
    %620 = vmatpush.msra.mxu0 %v35
    %621 = vmatpush.msra.mxu0 %v34
    %622 = vmatpush.msra.mxu0 %v33
    %623 = vmatmul.f32.gmra.mxu0 %v605
    %v624 = vpop.f32.mrf.mxu0
    %v625 = vadd.f32 0.0, %v624
    %626 = vdwg.mxu0
    %627 = vmatpush.msra.mxu0 0.0
    %628 = vmatpush.msra.mxu0 0.0
    %629 = vmatpush.msra.mxu0 0.0
    %630 = vmatpush.msra.mxu0 0.0
    %631 = vmatpush.msra.mxu0 0.0
    %632 = vmatpush.msra.mxu0 0.0
    %633 = vmatpush.msra.mxu0 0.0
    %634 = vmatpush.msra.mxu0 0.0
    %635 = vmatpush.msra.mxu0 0.0
    %636 = vmatpush.msra.mxu0 0.0
    %637 = vmatpush.msra.mxu0 0.0
    %638 = vmatpush.msra.mxu0 0.0
    %639 = vmatpush.msra.mxu0 %v20
    %640 = vmatpush.msra.mxu0 %v19
    %641 = vmatpush.msra.mxu0 %v18
    %642 = vmatpush.msra.mxu0 %v17
    %643 = vmatmul.f32.gmra.mxu0 %v535
    %v644 = vpop.f32.mrf.mxu0
    %v645 = vadd.f32 0.0, %v644
    %646 = vdwg.mxu0
    %v647 = vadd.f32 %v112, %v645
    %v648 = vtanh.pop %v647
    %v650 = vsel %vm123, %v648, 0
    %652 = vmatpush.msra.mxu0 0.0
    %653 = vmatpush.msra.mxu0 0.0
    %654 = vmatpush.msra.mxu0 0.0
    %655 = vmatpush.msra.mxu0 0.0
    %656 = vmatpush.msra.mxu0 0.0
    %657 = vmatpush.msra.mxu0 0.0
    %658 = vmatpush.msra.mxu0 0.0
    %659 = vmatpush.msra.mxu0 0.0
    %660 = vmatpush.msra.mxu0 0.0
    %661 = vmatpush.msra.mxu0 0.0
    %662 = vmatpush.msra.mxu0 0.0
    %663 = vmatpush.msra.mxu0 0.0
    %664 = vmatpush.msra.mxu0 %v24
    %665 = vmatpush.msra.mxu0 %v23
    %666 = vmatpush.msra.mxu0 %v22
    %667 = vmatpush.msra.mxu0 %v21
    %668 = vmatmul.f32.gmra.mxu0 %v650
    %v669 = vpop.f32.mrf.mxu0
    %v670 = vadd.f32 %v602, %v669
    %671 = vdwg.mxu0
    %v672 = vadd.f32 %v670, %v40
    %v673 = vtanh.pop %v672
    %v675 = vsel %vm123, %v673, 0
    %677 = vmatpush.msra.mxu0 0.0
    %678 = vmatpush.msra.mxu0 0.0
    %679 = vmatpush.msra.mxu0 0.0
    %680 = vmatpush.msra.mxu0 0.0
    %681 = vmatpush.msra.mxu0 0.0
    %682 = vmatpush.msra.mxu0 0.0
    %683 = vmatpush.msra.mxu0 0.0
    %684 = vmatpush.msra.mxu0 0.0
    %685 = vmatpush.msra.mxu0 0.0
    %686 = vmatpush.msra.mxu0 0.0
    %687 = vmatpush.msra.mxu0 0.0
    %688 = vmatpush.msra.mxu0 0.0
    %689 = vmatpush.msra.mxu0 %v32
    %690 = vmatpush.msra.mxu0 %v31
    %691 = vmatpush.msra.mxu0 %v30
    %692 = vmatpush.msra.mxu0 %v29
    %693 = vmatmul.f32.gmra.mxu0 %v675
    %v694 = vpop.f32.mrf.mxu0
    %v695 = vadd.f32 %v625, %v694
    %696 = vdwg.mxu0
    %v697 = vadd.f32 %v695, %v41
    %v698 = vtanh.pop %v697
    %699 = vmatpush.msra.mxu0 0.0
    %700 = vmatpush.msra.mxu0 0.0
    %701 = vmatpush.msra.mxu0 0.0
    %702 = vmatpush.msra.mxu0 0.0
    %703 = vmatpush.msra.mxu0 0.0
    %704 = vmatpush.msra.mxu0 0.0
    %705 = vmatpush.msra.mxu0 0.0
    %706 = vmatpush.msra.mxu0 0.0
    %707 = vmatpush.msra.mxu0 0.0
    %708 = vmatpush.msra.mxu0 0.0
    %709 = vmatpush.msra.mxu0 0.0
    %710 = vmatpush.msra.mxu0 0.0
    %711 = vmatpush.msra.mxu0 %v28
    %712 = vmatpush.msra.mxu0 %v27
    %713 = vmatpush.msra.mxu0 %v26
    %714 = vmatpush.msra.mxu0 %v25
    %715 = vmatmul.f32.gmra.mxu0 %v675
    %v716 = vpop.f32.mrf.mxu0
    %v717 = vadd.f32 0.0, %v716
    %718 = vdwg.mxu0
    %v720 = vsel %vm123, %v698, 0
    %722 = vmatpush.msra.mxu0 0.0
    %723 = vmatpush.msra.mxu0 0.0
    %724 = vmatpush.msra.mxu0 0.0
    %725 = vmatpush.msra.mxu0 0.0
    %726 = vmatpush.msra.mxu0 0.0
    %727 = vmatpush.msra.mxu0 0.0
    %728 = vmatpush.msra.mxu0 0.0
    %729 = vmatpush.msra.mxu0 0.0
    %730 = vmatpush.msra.mxu0 0.0
    %731 = vmatpush.msra.mxu0 0.0
    %732 = vmatpush.msra.mxu0 0.0
    %733 = vmatpush.msra.mxu0 0.0
    %734 = vmatpush.msra.mxu0 %v36
    %735 = vmatpush.msra.mxu0 %v35
    %736 = vmatpush.msra.mxu0 %v34
    %737 = vmatpush.msra.mxu0 %v33
    %738 = vmatmul.f32.gmra.mxu0 %v720
    %v739 = vpop.f32.mrf.mxu0
    %v740 = vadd.f32 0.0, %v739
    %741 = vdwg.mxu0
    %742 = vmatpush.msra.mxu0 0.0
    %743 = vmatpush.msra.mxu0 0.0
    %744 = vmatpush.msra.mxu0 0.0
    %745 = vmatpush.msra.mxu0 0.0
    %746 = vmatpush.msra.mxu0 0.0
    %747 = vmatpush.msra.mxu0 0.0
    %748 = vmatpush.msra.mxu0 0.0
    %749 = vmatpush.msra.mxu0 0.0
    %750 = vmatpush.msra.mxu0 0.0
    %751 = vmatpush.msra.mxu0 0.0
    %752 = vmatpush.msra.mxu0 0.0
    %753 = vmatpush.msra.mxu0 0.0
    %754 = vmatpush.msra.mxu0 %v20
    %755 = vmatpush.msra.mxu0 %v19
    %756 = vmatpush.msra.mxu0 %v18
    %757 = vmatpush.msra.mxu0 %v17
    %758 = vmatmul.f32.gmra.mxu0 %v650
    %v759 = vpop.f32.mrf.mxu0
    %v760 = vadd.f32 0.0, %v759
    %761 = vdwg.mxu0
    %v762 = vadd.f32 %v115, %v760
    %v763 = vtanh.pop %v762
    %v765 = vsel %vm123, %v763, 0
    %767 = vmatpush.msra.mxu0 0.0
    %768 = vmatpush.msra.mxu0 0.0
    %769 = vmatpush.msra.mxu0 0.0
    %770 = vmatpush.msra.mxu0 0.0
    %771 = vmatpush.msra.mxu0 0.0
    %772 = vmatpush.msra.mxu0 0.0
    %773 = vmatpush.msra.mxu0 0.0
    %774 = vmatpush.msra.mxu0 0.0
    %775 = vmatpush.msra.mxu0 0.0
    %776 = vmatpush.msra.mxu0 0.0
    %777 = vmatpush.msra.mxu0 0.0
    %778 = vmatpush.msra.mxu0 0.0
    %779 = vmatpush.msra.mxu0 %v24
    %780 = vmatpush.msra.mxu0 %v23
    %781 = vmatpush.msra.mxu0 %v22
    %782 = vmatpush.msra.mxu0 %v21
    %783 = vmatmul.f32.gmra.mxu0 %v765
    %v784 = vpop.f32.mrf.mxu0
    %v785 = vadd.f32 %v717, %v784
    %786 = vdwg.mxu0
    %v787 = vadd.f32 %v785, %v40
    %v788 = vtanh.pop %v787
    %v790 = vsel %vm123, %v788, 0
    %792 = vmatpush.msra.mxu0 0.0
    %793 = vmatpush.msra.mxu0 0.0
    %794 = vmatpush.msra.mxu0 0.0
    %795 = vmatpush.msra.mxu0 0.0
    %796 = vmatpush.msra.mxu0 0.0
    %797 = vmatpush.msra.mxu0 0.0
    %798 = vmatpush.msra.mxu0 0.0
    %799 = vmatpush.msra.mxu0 0.0
    %800 = vmatpush.msra.mxu0 0.0
    %801 = vmatpush.msra.mxu0 0.0
    %802 = vmatpush.msra.mxu0 0.0
    %803 = vmatpush.msra.mxu0 0.0
    %804 = vmatpush.msra.mxu0 %v32
    %805 = vmatpush.msra.mxu0 %v31
    %806 = vmatpush.msra.mxu0 %v30
    %807 = vmatpush.msra.mxu0 %v29
    %808 = vmatmul.f32.gmra.mxu0 %v790
    %v809 = vpop.f32.mrf.mxu0
    %v810 = vadd.f32 %v740, %v809
    %811 = vdwg.mxu0
    %v812 = vadd.f32 %v810, %v41
    %v813 = vtanh.pop %v812
    %814 = vmatpush.msra.mxu0 0.0
    %815 = vmatpush.msra.mxu0 0.0
    %816 = vmatpush.msra.mxu0 0.0
    %817 = vmatpush.msra.mxu0 0.0
    %818 = vmatpush.msra.mxu0 0.0
    %819 = vmatpush.msra.mxu0 0.0
    %820 = vmatpush.msra.mxu0 0.0
    %821 = vmatpush.msra.mxu0 0.0
    %822 = vmatpush.msra.mxu0 0.0
    %823 = vmatpush.msra.mxu0 0.0
    %824 = vmatpush.msra.mxu0 0.0
    %825 = vmatpush.msra.mxu0 0.0
    %826 = vmatpush.msra.mxu0 %v28
    %827 = vmatpush.msra.mxu0 %v27
    %828 = vmatpush.msra.mxu0 %v26
    %829 = vmatpush.msra.mxu0 %v25
    %830 = vmatmul.f32.gmra.mxu0 %v790
    %v831 = vpop.f32.mrf.mxu0
    %v832 = vadd.f32 0.0, %v831
    %833 = vdwg.mxu0
    %v835 = vsel %vm123, %v813, 0
    %837 = vmatpush.msra.mxu0 0.0
    %838 = vmatpush.msra.mxu0 0.0
    %839 = vmatpush.msra.mxu0 0.0
    %840 = vmatpush.msra.mxu0 0.0
    %841 = vmatpush.msra.mxu0 0.0
    %842 = vmatpush.msra.mxu0 0.0
    %843 = vmatpush.msra.mxu0 0.0
    %844 = vmatpush.msra.mxu0 0.0
    %845 = vmatpush.msra.mxu0 0.0
    %846 = vmatpush.msra.mxu0 0.0
    %847 = vmatpush.msra.mxu0 0.0
    %848 = vmatpush.msra.mxu0 0.0
    %849 = vmatpush.msra.mxu0 %v36
    %850 = vmatpush.msra.mxu0 %v35
    %851 = vmatpush.msra.mxu0 %v34
    %852 = vmatpush.msra.mxu0 %v33
    %853 = vmatmul.f32.gmra.mxu0 %v835
    %v854 = vpop.f32.mrf.mxu0
    %v855 = vadd.f32 0.0, %v854
    %856 = vdwg.mxu0
    %857 = vmatpush.msra.mxu0 0.0
    %858 = vmatpush.msra.mxu0 0.0
    %859 = vmatpush.msra.mxu0 0.0
    %860 = vmatpush.msra.mxu0 0.0
    %861 = vmatpush.msra.mxu0 0.0
    %862 = vmatpush.msra.mxu0 0.0
    %863 = vmatpush.msra.mxu0 0.0
    %864 = vmatpush.msra.mxu0 0.0
    %865 = vmatpush.msra.mxu0 0.0
    %866 = vmatpush.msra.mxu0 0.0
    %867 = vmatpush.msra.mxu0 0.0
    %868 = vmatpush.msra.mxu0 0.0
    %869 = vmatpush.msra.mxu0 %v20
    %870 = vmatpush.msra.mxu0 %v19
    %871 = vmatpush.msra.mxu0 %v18
    %872 = vmatpush.msra.mxu0 %v17
    %873 = vmatmul.f32.gmra.mxu0 %v765
    %v874 = vpop.f32.mrf.mxu0
    %v875 = vadd.f32 0.0, %v874
    %876 = vdwg.mxu0
    %v877 = vadd.f32 %v118, %v875
    %v878 = vtanh.pop %v877
    %v880 = vsel %vm123, %v878, 0
    %882 = vmatpush.msra.mxu0 0.0
    %883 = vmatpush.msra.mxu0 0.0
    %884 = vmatpush.msra.mxu0 0.0
    %885 = vmatpush.msra.mxu0 0.0
    %886 = vmatpush.msra.mxu0 0.0
    %887 = vmatpush.msra.mxu0 0.0
    %888 = vmatpush.msra.mxu0 0.0
    %889 = vmatpush.msra.mxu0 0.0
    %890 = vmatpush.msra.mxu0 0.0
    %891 = vmatpush.msra.mxu0 0.0
    %892 = vmatpush.msra.mxu0 0.0
    %893 = vmatpush.msra.mxu0 0.0
    %894 = vmatpush.msra.mxu0 %v24
    %895 = vmatpush.msra.mxu0 %v23
    %896 = vmatpush.msra.mxu0 %v22
    %897 = vmatpush.msra.mxu0 %v21
    %898 = vmatmul.f32.gmra.mxu0 %v880
    %v899 = vpop.f32.mrf.mxu0
    %v900 = vadd.f32 %v832, %v899
    %901 = vdwg.mxu0
    %v902 = vadd.f32 %v900, %v40
    %v903 = vtanh.pop %v902
    %v905 = vsel %vm123, %v903, 0
    %907 = vmatpush.msra.mxu0 0.0
    %908 = vmatpush.msra.mxu0 0.0
    %909 = vmatpush.msra.mxu0 0.0
    %910 = vmatpush.msra.mxu0 0.0
    %911 = vmatpush.msra.mxu0 0.0
    %912 = vmatpush.msra.mxu0 0.0
    %913 = vmatpush.msra.mxu0 0.0
    %914 = vmatpush.msra.mxu0 0.0
    %915 = vmatpush.msra.mxu0 0.0
    %916 = vmatpush.msra.mxu0 0.0
    %917 = vmatpush.msra.mxu0 0.0
    %918 = vmatpush.msra.mxu0 0.0
    %919 = vmatpush.msra.mxu0 %v32
    %920 = vmatpush.msra.mxu0 %v31
    %921 = vmatpush.msra.mxu0 %v30
    %922 = vmatpush.msra.mxu0 %v29
    %923 = vmatmul.f32.gmra.mxu0 %v905
    %v924 = vpop.f32.mrf.mxu0
    %v925 = vadd.f32 %v855, %v924
    %926 = vdwg.mxu0
    %v927 = vadd.f32 %v925, %v41
    %v928 = vtanh.pop %v927
    %929 = vmatpush.msra.mxu0 0.0
    %930 = vmatpush.msra.mxu0 0.0
    %931 = vmatpush.msra.mxu0 0.0
    %932 = vmatpush.msra.mxu0 0.0
    %933 = vmatpush.msra.mxu0 0.0
    %934 = vmatpush.msra.mxu0 0.0
    %935 = vmatpush.msra.mxu0 0.0
    %936 = vmatpush.msra.mxu0 0.0
    %937 = vmatpush.msra.mxu0 0.0
    %938 = vmatpush.msra.mxu0 0.0
    %939 = vmatpush.msra.mxu0 0.0
    %940 = vmatpush.msra.mxu0 0.0
    %941 = vmatpush.msra.mxu0 %v28
    %942 = vmatpush.msra.mxu0 %v27
    %943 = vmatpush.msra.mxu0 %v26
    %944 = vmatpush.msra.mxu0 %v25
    %945 = vmatmul.f32.gmra.mxu0 %v905
    %v946 = vpop.f32.mrf.mxu0
    %v947 = vadd.f32 0.0, %v946
    %948 = vdwg.mxu0
    %v950 = vsel %vm123, %v928, 0
    %952 = vmatpush.msra.mxu0 0.0
    %953 = vmatpush.msra.mxu0 0.0
    %954 = vmatpush.msra.mxu0 0.0
    %955 = vmatpush.msra.mxu0 0.0
    %956 = vmatpush.msra.mxu0 0.0
    %957 = vmatpush.msra.mxu0 0.0
    %958 = vmatpush.msra.mxu0 0.0
    %959 = vmatpush.msra.mxu0 0.0
    %960 = vmatpush.msra.mxu0 0.0
    %961 = vmatpush.msra.mxu0 0.0
    %962 = vmatpush.msra.mxu0 0.0
    %963 = vmatpush.msra.mxu0 0.0
    %964 = vmatpush.msra.mxu0 %v36
    %965 = vmatpush.msra.mxu0 %v35
    %966 = vmatpush.msra.mxu0 %v34
    %967 = vmatpush.msra.mxu0 %v33
    %968 = vmatmul.f32.gmra.mxu0 %v950
    %v969 = vpop.f32.mrf.mxu0
    %v970 = vadd.f32 0.0, %v969
    %971 = vdwg.mxu0
    %972 = vmatpush.msra.mxu0 0.0
    %973 = vmatpush.msra.mxu0 0.0
    %974 = vmatpush.msra.mxu0 0.0
    %975 = vmatpush.msra.mxu0 0.0
    %976 = vmatpush.msra.mxu0 0.0
    %977 = vmatpush.msra.mxu0 0.0
    %978 = vmatpush.msra.mxu0 0.0
    %979 = vmatpush.msra.mxu0 0.0
    %980 = vmatpush.msra.mxu0 0.0
    %981 = vmatpush.msra.mxu0 0.0
    %982 = vmatpush.msra.mxu0 0.0
    %983 = vmatpush.msra.mxu0 0.0
    %984 = vmatpush.msra.mxu0 %v20
    %985 = vmatpush.msra.mxu0 %v19
    %986 = vmatpush.msra.mxu0 %v18
    %987 = vmatpush.msra.mxu0 %v17
    %988 = vmatmul.f32.gmra.mxu0 %v880
    %v989 = vpop.f32.mrf.mxu0
    %v990 = vadd.f32 0.0, %v989
    %991 = vdwg.mxu0
    %v992 = vadd.f32 %v121, %v990
    %v993 = vtanh.pop %v992
    %v995 = vsel %vm123, %v993, 0
    %997 = vmatpush.msra.mxu0 0.0
    %998 = vmatpush.msra.mxu0 0.0
    %999 = vmatpush.msra.mxu0 0.0
    %1000 = vmatpush.msra.mxu0 0.0
    %1001 = vmatpush.msra.mxu0 0.0
    %1002 = vmatpush.msra.mxu0 0.0
    %1003 = vmatpush.msra.mxu0 0.0
    %1004 = vmatpush.msra.mxu0 0.0
    %1005 = vmatpush.msra.mxu0 0.0
    %1006 = vmatpush.msra.mxu0 0.0
    %1007 = vmatpush.msra.mxu0 0.0
    %1008 = vmatpush.msra.mxu0 0.0
    %1009 = vmatpush.msra.mxu0 %v24
    %1010 = vmatpush.msra.mxu0 %v23
    %1011 = vmatpush.msra.mxu0 %v22
    %1012 = vmatpush.msra.mxu0 %v21
    %1013 = vmatmul.f32.gmra.mxu0 %v995
    %v1014 = vpop.f32.mrf.mxu0
    %v1015 = vadd.f32 %v947, %v1014
    %1016 = vdwg.mxu0
    %v1017 = vadd.f32 %v1015, %v40
    %v1018 = vtanh.pop %v1017
    %v1020 = vsel %vm123, %v1018, 0
    %1022 = vmatpush.msra.mxu0 0.0
    %1023 = vmatpush.msra.mxu0 0.0
    %1024 = vmatpush.msra.mxu0 0.0
    %1025 = vmatpush.msra.mxu0 0.0
    %1026 = vmatpush.msra.mxu0 0.0
    %1027 = vmatpush.msra.mxu0 0.0
    %1028 = vmatpush.msra.mxu0 0.0
    %1029 = vmatpush.msra.mxu0 0.0
    %1030 = vmatpush.msra.mxu0 0.0
    %1031 = vmatpush.msra.mxu0 0.0
    %1032 = vmatpush.msra.mxu0 0.0
    %1033 = vmatpush.msra.mxu0 0.0
    %1034 = vmatpush.msra.mxu0 %v32
    %1035 = vmatpush.msra.mxu0 %v31
    %1036 = vmatpush.msra.mxu0 %v30
    %1037 = vmatpush.msra.mxu0 %v29
    %1038 = vmatmul.f32.gmra.mxu0 %v1020
    %v1039 = vpop.f32.mrf.mxu0
    %v1040 = vadd.f32 %v970, %v1039
    %1041 = vdwg.mxu0
    %v1042 = vadd.f32 %v1040, %v41
    %v1043 = vtanh.pop %v1042
    %v1045 = vsel %vm123, %v1043, 0
    %1047 = vmatpush.msra.mxu0 0.0
    %1048 = vmatpush.msra.mxu0 0.0
    %1049 = vmatpush.msra.mxu0 0.0
    %1050 = vmatpush.msra.mxu0 0.0
    %1051 = vmatpush.msra.mxu0 0.0
    %1052 = vmatpush.msra.mxu0 0.0
    %1053 = vmatpush.msra.mxu0 0.0
    %1054 = vmatpush.msra.mxu0 0.0
    %1055 = vmatpush.msra.mxu0 0.0
    %1056 = vmatpush.msra.mxu0 0.0
    %1057 = vmatpush.msra.mxu0 0.0
    %1058 = vmatpush.msra.mxu0 0.0
    %1059 = vmatpush.msra.mxu0 %v45
    %1060 = vmatpush.msra.mxu0 %v44
    %1061 = vmatpush.msra.mxu0 %v43
    %1062 = vmatpush.msra.mxu0 %v42
    %1063 = vmatmul.f32.gmra.mxu0 %v1045
    %v1064 = vpop.f32.mrf.mxu0
    %v1065 = vadd.f32 %v47, %v1064
    %1066 = vdwg.mxu0
    %1067 = vst [vmem:[#allocation2] sm:$0xff] %v1065
    // Predicated region
    $region14: #{tpu_custom_call.1} parent=1 // pred_check
      _
    $region15: #{tpu_custom_call.1} parent=1 // pred_check_branch
      %1069 = sbr.rel (0) target = $region17
    $region16: #{tpu_custom_call.1} parent=1 // pred_region
      %1071 = vsyncadd [#allocation3], 0
      %s1073 = sshll.u32 [#allocation2], 4
      %s1074 = int_to_ptr.vmem [resolvable:$true] %s1073
      %s1075 = sshll.u32 %s3, 4
      %s1076 = int_to_ptr.hbm [resolvable:$true] %s1075
      %1078 = dma.vmem_to_hbm [thread:$0]  %s1074, 128, %s1076, [#allocation3]
    $region17: #{tpu_custom_call.1} parent=1 // pred_fallthru
      _
    // Predicated region
    $region18: #{tpu_custom_call.1} parent=1 // pred_check
      _
    $region19: #{tpu_custom_call.1} parent=1 // pred_check_branch
      %1080 = sbr.rel (0) target = $region21
    $region20: #{tpu_custom_call.1} parent=1 // pred_region
      %1082 = dma.done [#allocation3], 128
    $region21: #{tpu_custom_call.1} parent=1 // pred_fallthru
      _
    %1083 = vsyncpa [#allocation3], 1

</llo_original>
